<compile_context>
chip_gen: v6e
topology: v6e:2x2x1
jax: 0.10.0
libtpu: 0.0.40
codegen_flags: <defaults>
</compile_context>

<pallas_src>
import functools
from dataclasses import dataclass

import jax
import jax.numpy as jnp
from jax.experimental import pallas as pl
from jax.experimental.pallas import tpu as pltpu


@dataclass
class GMM2D:
    """Minimal stand-in for the project's GMM2D container (means only)."""
    u_x: jax.Array  # [N, K]
    u_y: jax.Array  # [N, K]

    def copy(self):
        return GMM2D(self.u_x, self.u_y)


_HINGE = -0.2
_MAX_TILE_ROWS = 4096   # GMM pairs per grid step (multiple of 8).
_NUM_SPLITS = 2         # leading "parallel" grid axis -> v7x dual TensorCore.
_OUT_SUBLANES = 8       # per-split output block is a full (8, 128) tile.
_OUT_LANES = 128


def _rel_hinge_kernel(a_ref, b_ref, o_ref, acc_ref, *, n_total, tile_rows):
    """One tile: a_ref/b_ref are (tile_rows, K) blocks of the [N, K] inputs."""
    c = pl.program_id(0)            # split (core) index
    j = pl.program_id(1)            # row-block index within this split
    inner = pl.num_programs(1)
    blk = c * inner + j             # logical row-block id (may run past the end)
    row0 = blk * tile_rows          # first logical row covered by this step

    @pl.when(j == 0)
    def _init():
        acc_ref[...] = jnp.zeros_like(acc_ref)

    # Native-dtype DMA; cast to f32 in-kernel (halves HBM bytes for bf16 inputs).
    a = a_ref[...].astype(jnp.float32)
    b = b_ref[...].astype(jnp.float32)

    # Per-row reduction over the K mixture components (minor axis).
    diff = (jnp.max(a, axis=-1, keepdims=True)
            - jnp.min(b, axis=-1, keepdims=True))            # (tile_rows, 1)
    hinged = jnp.maximum(diff, jnp.float32(_HINGE))

    # Only blocks overlapping (or past) the end of the array need masking.
    needs_mask = row0 + tile_rows > n_total

    @pl.when(jnp.logical_not(needs_mask))
    def _accumulate_full():
        acc_ref[...] += hinged

    @pl.when(needs_mask)
    def _accumulate_masked():
        rows = jax.lax.broadcasted_iota(jnp.int32, hinged.shape, 0) + row0
        acc_ref[...] += jnp.where(rows < n_total, hinged, jnp.float32(0.0))

    # Single cross-sublane reduce + store, once per split.
    @pl.when(j == inner - 1)
    def _finalize():
        o_ref[...] = jnp.broadcast_to(jnp.sum(acc_ref[...]), o_ref.shape)


def _rel_hinge_pallas(a: jax.Array, b: jax.Array) -> jax.Array:
    """sum(max(row_max(a) - row_min(b), -0.2)) over rows of [N, K] a, b."""
    assert a.shape == b.shape and a.ndim == 2
    n, k = a.shape

    # Block over rows of the untransposed [N, K] arrays.  tile_rows is a
    # multiple of 8 (sublane constraint) or the full N for small inputs.
    tile_rows = n if n <= _MAX_TILE_ROWS else _MAX_TILE_ROWS
    total_blocks = pl.cdiv(n, tile_rows)
    num_splits = _NUM_SPLITS if total_blocks >= _NUM_SPLITS else 1
    inner = pl.cdiv(total_blocks, num_splits)

    # Clamp so the index map never points past the last real block; the
    # duplicated block (odd block counts) is fully masked inside the kernel.
    def row_block(c, j):
        return (jnp.minimum(c * inner + j, total_blocks - 1), 0)

    kernel = functools.partial(_rel_hinge_kernel, n_total=n, tile_rows=tile_rows)

    out = pl.pallas_call(
        kernel,
        out_shape=jax.ShapeDtypeStruct(
            (num_splits * _OUT_SUBLANES, _OUT_LANES), jnp.float32),
        grid=(num_splits, inner),
        in_specs=[
            pl.BlockSpec((tile_rows, k), row_block),
            pl.BlockSpec((tile_rows, k), row_block),
        ],
        out_specs=pl.BlockSpec((_OUT_SUBLANES, _OUT_LANES), lambda c, j: (c, 0)),
        scratch_shapes=[pltpu.VMEM((tile_rows, 1), jnp.float32)],
        compiler_params=pltpu.CompilerParams(
            dimension_semantics=("parallel", "arbitrary"),
            vmem_limit_bytes=32 * 1024 * 1024,
        ),
        cost_estimate=pl.CostEstimate(
            flops=2 * n * k + 2 * n,
            transcendentals=0,
            bytes_accessed=(2 * n * k * a.dtype.itemsize
                            + num_splits * _OUT_SUBLANES * _OUT_LANES * 4),
        ),
    )(a, b)

    # One tiny scalar combine of the per-split partial sums.
    return jnp.sum(out[::_OUT_SUBLANES, 0])


def rel_hinge_loss(gmm1: GMM2D, gmm2: GMM2D, relation_name: str) -> jax.Array:
    gmm1 = gmm1.copy()
    gmm2 = gmm2.copy()
    # Relation-name dispatch is host-side glue (static string), done here.
    # TODO(synk): callers evaluating several relations on the same GMM pair
    # could fuse them into one kernel that reads u_x/u_y once (review item 7).
    if relation_name == "above":
        a, b = gmm1.u_y, gmm2.u_y
    elif relation_name == "below":
        a, b = gmm2.u_y, gmm1.u_y
    elif relation_name == "left of":
        a, b = gmm1.u_x, gmm2.u_x
    elif relation_name == "right of":
        a, b = gmm2.u_x, gmm1.u_x
    else:
        raise Exception(f"Unknown relation: {relation_name}")
    return _rel_hinge_pallas(a, b)


def _reference_loss(gmm1: GMM2D, gmm2: GMM2D, relation_name: str) -> jax.Array:
    """Pure-JAX reference (mirrors the torch code) for verification."""
    if relation_name == "above":
        diff = jnp.max(gmm1.u_y, axis=-1) - jnp.min(gmm2.u_y, axis=-1)
    elif relation_name == "below":
        diff = jnp.max(gmm2.u_y, axis=-1) - jnp.min(gmm1.u_y, axis=-1)
    elif relation_name == "left of":
        diff = jnp.max(gmm1.u_x, axis=-1) - jnp.min(gmm2.u_x, axis=-1)
    elif relation_name == "right of":
        diff = jnp.max(gmm2.u_x, axis=-1) - jnp.min(gmm1.u_x, axis=-1)
    else:
        raise Exception(f"Unknown relation: {relation_name}")
    return jnp.sum(jnp.maximum(diff, -0.2))


def _make_gmms(n, k, key):
    k1, k2, k3, k4 = jax.random.split(key, 4)
    gmm1 = GMM2D(
        u_x=jax.random.normal(k1, (n, k), dtype=jnp.float32),
        u_y=jax.random.normal(k2, (n, k), dtype=jnp.float32),
    )
    gmm2 = GMM2D(
        u_x=jax.random.normal(k3, (n, k), dtype=jnp.float32),
        u_y=jax.random.normal(k4, (n, k), dtype=jnp.float32),
    )
    return gmm1, gmm2


if __name__ == "__main__":
    key = jax.random.PRNGKey(0)
    key_small, key_big = jax.random.split(key, 2)

    ok = True

    # Small config: 37 GMM pairs, 4 mixture components (single full block).
    gmm1, gmm2 = _make_gmms(37, 4, key_small)
    for rel in ("above", "below", "left of", "right of"):
        out = jax.block_until_ready(rel_hinge_loss(gmm1, gmm2, rel))
        ref = jax.block_until_ready(_reference_loss(gmm1, gmm2, rel))
        if not jnp.allclose(out, ref, atol=1e-5, rtol=1e-5):
            ok = False
            print(f"MISMATCH for relation '{rel}' (N=37): kernel={out} ref={ref}")

    # Larger config exercising multi-block tiling, the two-way split, the
    # duplicated-block mask and the partial last block.
    gmm1_b, gmm2_b = _make_gmms(20000, 4, key_big)
    out = jax.block_until_ready(rel_hinge_loss(gmm1_b, gmm2_b, "above"))
    ref = jax.block_until_ready(_reference_loss(gmm1_b, gmm2_b, "above"))
    if not jnp.allclose(out, ref, atol=1e-3, rtol=1e-5):
        ok = False
        print(f"MISMATCH for relation 'above' (N=20000): kernel={out} ref={ref}")

    if ok:
        print("KERNEL_OK")
</pallas_src>

<mosaic_0001>
module attributes {stable_mosaic.version = 11 : i64} {
  func.func @_rel_hinge_kernel(%arg0: i32, %arg1: i32, %arg2: memref<37x4xf32, #tpu.memory_space<vmem>>, %arg3: memref<37x4xf32, #tpu.memory_space<vmem>>, %arg4: memref<8x128xf32, #tpu.memory_space<vmem>>, %arg5: memref<37x1xf32, #tpu.memory_space<vmem>>) attributes {dimension_semantics = [#tpu.dimension_semantics<parallel>, #tpu.dimension_semantics<arbitrary>], iteration_bounds = array<i64: 1, 1>, scalar_prefetch = 0 : i64, scratch_operands = 1 : i64, tpu.core_type = #tpu.core_type<tc>, window_params = [{transform_indices = @transform_0, window_bounds = array<i64: 37, 4>}, {transform_indices = @transform_1, window_bounds = array<i64: 37, 4>}, {transform_indices = @transform_2, window_bounds = array<i64: 8, 128>}]} {
    %c1_i32 = arith.constant 1 : i32
    %0 = arith.muli %arg0, %c1_i32 : i32
    %1 = arith.addi %0, %arg1 : i32
    %c37_i32 = arith.constant 37 : i32
    %2 = arith.muli %1, %c37_i32 : i32
    %c0_i32 = arith.constant 0 : i32
    %3 = arith.cmpi eq, %arg1, %c0_i32 : i32
    %4 = arith.extui %3 : i1 to i32
    %c0_i32_0 = arith.constant 0 : i32
    %5 = arith.cmpi ne, %4, %c0_i32_0 : i32
    scf.if %5 {
      %cst_12 = arith.constant 0.000000e+00 : f32
      %25 = vector.broadcast %cst_12 : f32 to vector<37x1xf32>
      %c0_13 = arith.constant 0 : index
      %c0_14 = arith.constant 0 : index
      %26 = vector.load %arg5[%c0_13, %c0_14] : memref<37x1xf32, #tpu.memory_space<vmem>>, vector<37x1xf32>
      tpu.vector_store %arg5[%c0_13, %c0_14], %25 {strides = array<i32>} : memref<37x1xf32, #tpu.memory_space<vmem>>, vector<37x1xf32>,
    } else {
    }
    %c0 = arith.constant 0 : index
    %c0_1 = arith.constant 0 : index
    %6 = vector.load %arg2[%c0, %c0_1] : memref<37x4xf32, #tpu.memory_space<vmem>>, vector<37x4xf32>
    %c0_2 = arith.constant 0 : index
    %c0_3 = arith.constant 0 : index
    %7 = vector.load %arg3[%c0_2, %c0_3] : memref<37x4xf32, #tpu.memory_space<vmem>>, vector<37x4xf32>
    %cst = arith.constant dense<0xFF800000> : vector<37xf32>
    %8 = vector.multi_reduction <maximumf>, %6, %cst [1] : vector<37x4xf32> to vector<37xf32>
    %9 = vector.shape_cast %8 : vector<37xf32> to vector<37x1xf32>
    %cst_4 = arith.constant dense<0x7F800000> : vector<37xf32>
    %10 = vector.multi_reduction <minimumf>, %7, %cst_4 [1] : vector<37x4xf32> to vector<37xf32>
    %11 = vector.shape_cast %10 : vector<37xf32> to vector<37x1xf32>
    %12 = arith.subf %9, %11 : vector<37x1xf32>
    %cst_5 = arith.constant -2.000000e-01 : f32
    %13 = vector.broadcast %cst_5 : f32 to vector<37x1xf32>
    %14 = arith.maximumf %12, %13 : vector<37x1xf32>
    %c37_i32_6 = arith.constant 37 : i32
    %15 = arith.addi %2, %c37_i32_6 : i32
    %c37_i32_7 = arith.constant 37 : i32
    %16 = arith.cmpi sgt, %15, %c37_i32_7 : i32
    %true = arith.constant true
    %17 = arith.xori %16, %true : i1
    %18 = arith.extui %17 : i1 to i32
    %c0_i32_8 = arith.constant 0 : i32
    %19 = arith.cmpi ne, %18, %c0_i32_8 : i32
    scf.if %19 {
      %c0_12 = arith.constant 0 : index
      %c0_13 = arith.constant 0 : index
      %25 = vector.load %arg5[%c0_12, %c0_13] : memref<37x1xf32, #tpu.memory_space<vmem>>, vector<37x1xf32>
      %26 = arith.addf %25, %14 : vector<37x1xf32>
      %c0_14 = arith.constant 0 : index
      %c0_15 = arith.constant 0 : index
      %27 = vector.load %arg5[%c0_14, %c0_15] : memref<37x1xf32, #tpu.memory_space<vmem>>, vector<37x1xf32>
      tpu.vector_store %arg5[%c0_14, %c0_15], %26 {strides = array<i32>} : memref<37x1xf32, #tpu.memory_space<vmem>>, vector<37x1xf32>,
    } else {
    }
    %20 = arith.extui %16 : i1 to i32
    %c0_i32_9 = arith.constant 0 : i32
    %21 = arith.cmpi ne, %20, %c0_i32_9 : i32
    scf.if %21 {
      %25 = tpu.iota {dimensions = array<i32: 0>} : vector<37x1xi32>
      %26 = vector.broadcast %2 : i32 to vector<37x1xi32>
      %27 = arith.addi %25, %26 : vector<37x1xi32>
      %c0_12 = arith.constant 0 : index
      %c0_13 = arith.constant 0 : index
      %28 = vector.load %arg5[%c0_12, %c0_13] : memref<37x1xf32, #tpu.memory_space<vmem>>, vector<37x1xf32>
      %c37_i32_14 = arith.constant 37 : i32
      %29 = vector.broadcast %c37_i32_14 : i32 to vector<37x1xi32>
      %30 = arith.cmpi slt, %27, %29 : vector<37x1xi32>
      %cst_15 = arith.constant 0.000000e+00 : f32
      %31 = vector.broadcast %cst_15 : f32 to vector<37x1xf32>
      %32 = arith.select %30, %14, %31 : vector<37x1xi1>, vector<37x1xf32>
      %33 = arith.addf %28, %32 : vector<37x1xf32>
      %c0_16 = arith.constant 0 : index
      %c0_17 = arith.constant 0 : index
      %34 = vector.load %arg5[%c0_16, %c0_17] : memref<37x1xf32, #tpu.memory_space<vmem>>, vector<37x1xf32>
      tpu.vector_store %arg5[%c0_16, %c0_17], %33 {strides = array<i32>} : memref<37x1xf32, #tpu.memory_space<vmem>>, vector<37x1xf32>,
    } else {
    }
    %c0_i32_10 = arith.constant 0 : i32
    %22 = arith.cmpi eq, %arg1, %c0_i32_10 : i32
    %23 = arith.extui %22 : i1 to i32
    %c0_i32_11 = arith.constant 0 : i32
    %24 = arith.cmpi ne, %23, %c0_i32_11 : i32
    scf.if %24 {
      %c0_12 = arith.constant 0 : index
      %c0_13 = arith.constant 0 : index
      %25 = vector.load %arg5[%c0_12, %c0_13] : memref<37x1xf32, #tpu.memory_space<vmem>>, vector<37x1xf32>
      %26 = vector.shape_cast %25 : vector<37x1xf32> to vector<1x37x1xf32>
      %cst_14 = arith.constant dense<0.000000e+00> : vector<1xf32>
      %27 = vector.multi_reduction <add>, %26, %cst_14 [1, 2] : vector<1x37x1xf32> to vector<1xf32>
      %28 = vector.shape_cast %27 : vector<1xf32> to vector<1x1x1xf32>
      %29 = vector.extract %28[0, 0, 0] : f32 from vector<1x1x1xf32>
      %30 = vector.broadcast %29 : f32 to vector<8x128xf32>
      %c0_15 = arith.constant 0 : index
      %c0_16 = arith.constant 0 : index
      %31 = vector.load %arg4[%c0_15, %c0_16] : memref<8x128xf32, #tpu.memory_space<vmem>>, vector<8x128xf32>
      tpu.vector_store %arg4[%c0_15, %c0_16], %30 {strides = array<i32>} : memref<8x128xf32, #tpu.memory_space<vmem>>, vector<8x128xf32>,
    } else {
    }
    return
  }
  func.func @transform_0(%arg0: i32, %arg1: i32) -> (i32, i32) {
    %c1_i32 = arith.constant 1 : i32
    %0 = arith.muli %arg0, %c1_i32 : i32
    %1 = arith.addi %0, %arg1 : i32
    %c0_i32 = arith.constant 0 : i32
    %2 = arith.minsi %1, %c0_i32 : i32
    %c0_i32_0 = arith.constant 0 : i32
    %c0_i32_1 = arith.constant 0 : i32
    return %2, %c0_i32_0 : i32, i32
  }
  func.func @transform_1(%arg0: i32, %arg1: i32) -> (i32, i32) {
    %c1_i32 = arith.constant 1 : i32
    %0 = arith.muli %arg0, %c1_i32 : i32
    %1 = arith.addi %0, %arg1 : i32
    %c0_i32 = arith.constant 0 : i32
    %2 = arith.minsi %1, %c0_i32 : i32
    %c0_i32_0 = arith.constant 0 : i32
    %c0_i32_1 = arith.constant 0 : i32
    return %2, %c0_i32_0 : i32, i32
  }
  func.func @transform_2(%arg0: i32, %arg1: i32) -> (i32, i32) {
    %c0_i32 = arith.constant 0 : i32
    %c0_i32_0 = arith.constant 0 : i32
    return %arg0, %c0_i32 : i32, i32
  }
}

</mosaic_0001>

<llo_original>
// kernel: tpu_custom_call.1
$region0: #{tpu_custom_call.1}
  #allocation0 [shape = 'u32[]', space=smem, size = 0x4, offset = 0x4, fixed_abs, tag = 'smem constant byte address 0x4 - core index']
  #allocation1 [shape = 'u32[144,128]{1,0:T(1,128)}', space=vmem, size = 0x12000, scoped, tag = 'internal scratch']
  #allocation2 [shape = 'f32[37,1]{1,0:T(8,128)}', space=vmem, size = 0x5000, scoped, tag = 'scratch operand']
  %s0 = inlined_call_operand.vmem [shape: f32[37,4], index: 0, kind: input, shape index: {}]
  %s1 = inlined_call_operand.vmem [shape: f32[37,4], index: 1, kind: input, shape index: {}]
  %s2 = inlined_call_operand.hbm [shape: f32[8,128], index: 2, kind: output, shape index: {}]
  %s3 = sld [smem:[#allocation0]]
  $region34: #{tpu_custom_call.1} parent=0
    _
  %s5 = ssub.s32 1, %s3
  %s6 = scalar_select 0, %s5, %s3
  $region1: #{tpu_custom_call.1} parent=0
    #allocation3 [shape = 'u8[4096]{0}', space=vmem, size = 0x1000, scoped, tag = 'output window, operand 0, single buffered']
    #allocation4 [shape = 's32[1]{0}', space=sflag, size = 0x4, scoped, tag = 'scoped memory for tpu_custom_call.1']
    %7 = vsyncpa [#allocation4], 0
    // Predicated region
    $region2: #{tpu_custom_call.1} parent=1 // pred_check
      _
    $region3: #{tpu_custom_call.1} parent=1 // pred_check_branch
      %9 = sbr.rel (0) target = $region5
    $region4: #{tpu_custom_call.1} parent=1 // pred_region
      %s10 = sadd.s32 0, 0
      %p11 = scmp.lt.s32.totalorder %s10, 0
      %s12 = scalar_select %p11, %s10, 0
      %s13 = smul.u32 5, %s12
      %p14 = scmp.lt.s32.totalorder %s13, 4
      %s15 = scalar_select %p14, %s13, 4
      %s16 = smul.addr %s15, 8
      %s17 = scalar_lea.vmem %s0, %s16
      %s18 = sadd.s32 0, 0
      %p19 = scmp.lt.s32.totalorder %s18, 0
      %s20 = scalar_select %p19, %s18, 0
      %s21 = smul.u32 5, %s20
    $region5: #{tpu_custom_call.1} parent=1 // pred_fallthru
      _
    // Predicated region
    $region6: #{tpu_custom_call.1} parent=1 // pred_check
      _
    $region7: #{tpu_custom_call.1} parent=1 // pred_check_branch
      %23 = sbr.rel (0) target = $region9
    $region8: #{tpu_custom_call.1} parent=1 // pred_region
      %s24 = sadd.s32 0, 0
      %p25 = scmp.lt.s32.totalorder %s24, 0
      %s26 = scalar_select %p25, %s24, 0
      %s27 = smul.u32 5, %s26
      %p28 = scmp.lt.s32.totalorder %s27, 4
      %s29 = scalar_select %p28, %s27, 4
      %s30 = smul.addr %s29, 8
      %s31 = scalar_lea.vmem %s1, %s30
      %s32 = sadd.s32 0, 0
      %p33 = scmp.lt.s32.totalorder %s32, 0
      %s34 = scalar_select %p33, %s32, 0
      %s35 = smul.u32 5, %s34
    $region9: #{tpu_custom_call.1} parent=1 // pred_fallthru
      _
    %s36 = sadd.s32 0, 0
    %p37 = scmp.lt.s32.totalorder %s36, 0
    %s38 = scalar_select %p37, %s36, 0
    %s39 = smul.u32 5, %s38
    %p40 = scmp.lt.s32.totalorder %s39, 4
    %s41 = scalar_select %p40, %s39, 4
    %s42 = smul.addr %s41, 8
    %s43 = scalar_lea.vmem %s0, %s42
    %s44 = sadd.s32 0, 0
    %p45 = scmp.lt.s32.totalorder %s44, 0
    %s46 = scalar_select %p45, %s44, 0
    %s47 = smul.u32 5, %s46
    %p48 = scmp.lt.s32.totalorder %s47, 4
    %s49 = scalar_select %p48, %s47, 4
    %s50 = smul.addr %s49, 8
    %s51 = scalar_lea.vmem %s1, %s50
    %s52 = sadd.s32 0, 0
    %p53 = scmp.lt.s32.totalorder %s52, 0
    %s54 = scalar_select %p53, %s52, 0
    %s55 = smul.u32 5, %s54
    %p56 = scmp.lt.s32.totalorder %s55, 4
    %s57 = scalar_select %p56, %s55, 4
    %s58 = smul.addr %s57, 8
    %s59 = scalar_lea.vmem %s0, %s58
    %s60 = sadd.s32 0, 0
    %p61 = scmp.lt.s32.totalorder %s60, 0
    %s62 = scalar_select %p61, %s60, 0
    %s63 = smul.u32 5, %s62
    %s64 = sadd.s32 0, 0
    %p65 = scmp.lt.s32.totalorder %s64, 0
    %s66 = scalar_select %p65, %s64, 0
    %s67 = smul.u32 5, %s66
    %p68 = scmp.lt.s32.totalorder %s67, 4
    %s69 = scalar_select %p68, %s67, 4
    %s70 = smul.addr %s69, 8
    %s71 = scalar_lea.vmem %s1, %s70
    %s72 = sadd.s32 0, 0
    %p73 = scmp.lt.s32.totalorder %s72, 0
    %s74 = scalar_select %p73, %s72, 0
    %s75 = smul.u32 5, %s74
    %s76 = sadd.s32 0, 0
    %s77 = smul.u32 %s76, 37
    %p78 = scmp.eq.s32.totalorder 0, 0
    // Predicated region
    $region10: #{tpu_custom_call.1} parent=1 // pred_check
      %p79 = pneg %p78
    $region11: #{tpu_custom_call.1} parent=1 // pred_check_branch
      %81 = sbr.rel (%p79) target = $region13
    $region12: #{tpu_custom_call.1} parent=1 // pred_region
      %vm82 = vcmask 7168
      %83 = vst.msk [vmem:[#allocation2] sm:$0xff] %vm82, 0.0
      %84 = vst.msk [vmem:[#allocation2 + $0x8] sm:$0xff] %vm82, 0.0
      %85 = vst.msk [vmem:[#allocation2 + $0x10] sm:$0xff] %vm82, 0.0
      %86 = vst.msk [vmem:[#allocation2 + $0x18] sm:$0xff] %vm82, 0.0
      %vm87 = vcmask 4096
      %88 = vst.msk [vmem:[#allocation2 + $0x20] sm:$0x1f] %vm87, 0.0
    $region13: #{tpu_custom_call.1} parent=1 // pred_fallthru
      _
    %v89 = vld [vmem:[%s59] sm:$0xff]
    %v90 = vld [vmem:[%s59 + $0x8] sm:$0xff]
    %v91 = vld [vmem:[%s59 + $0x10] sm:$0xff]
    %v92 = vld [vmem:[%s59 + $0x18] sm:$0xff]
    %v93 = vld [vmem:[%s59 + $0x20] sm:$0x1f]
    %v94 = vld [vmem:[%s71] sm:$0xff]
    %v95 = vld [vmem:[%s71 + $0x8] sm:$0xff]
    %v96 = vld [vmem:[%s71 + $0x10] sm:$0xff]
    %v97 = vld [vmem:[%s71 + $0x18] sm:$0xff]
    %v98 = vld [vmem:[%s71 + $0x20] sm:$0x1f]
    %vm99 = vcmask 31744
    %v100 = vsel %vm99, %v89, -inf
    %101 = vmax.xlane.f32.xlu0 %v100
    %v102 = vpop.xlane.xlu0 %101
    %v103 = vsel %vm99, %v90, -inf
    %104 = vmax.xlane.f32.xlu0 %v103
    %v105 = vpop.xlane.xlu0 %104
    %v106 = vsel %vm99, %v91, -inf
    %107 = vmax.xlane.f32.xlu0 %v106
    %v108 = vpop.xlane.xlu0 %107
    %v109 = vsel %vm99, %v92, -inf
    %110 = vmax.xlane.f32.xlu0 %v109
    %v111 = vpop.xlane.xlu0 %110
    %vm112 = vcmask 28672
    %v113 = vsel %vm112, %v93, -inf
    %114 = vmax.xlane.f32.xlu0 %v113
    %v115 = vpop.xlane.xlu0 %114
    %v116 = vsel %vm99, %v94, inf
    %117 = vmin.xlane.f32.xlu0 %v116
    %v118 = vpop.xlane.xlu0 %117
    %v119 = vsel %vm99, %v95, inf
    %120 = vmin.xlane.f32.xlu0 %v119
    %v121 = vpop.xlane.xlu0 %120
    %v122 = vsel %vm99, %v96, inf
    %123 = vmin.xlane.f32.xlu0 %v122
    %v124 = vpop.xlane.xlu0 %123
    %v125 = vsel %vm99, %v97, inf
    %126 = vmin.xlane.f32.xlu0 %v125
    %v127 = vpop.xlane.xlu0 %126
    %v128 = vsel %vm112, %v98, inf
    %129 = vmin.xlane.f32.xlu0 %v128
    %v130 = vpop.xlane.xlu0 %129
    %v131 = vsub.f32 %v102, %v118
    %v132 = vsub.f32 %v105, %v121
    %v133 = vsub.f32 %v108, %v124
    %v134 = vsub.f32 %v111, %v127
    %v135 = vsub.f32 %v115, %v130
    %v136 = vmax.f32 %v131, -0.2
    %v137 = vmax.f32 %v132, -0.2
    %v138 = vmax.f32 %v133, -0.2
    %v139 = vmax.f32 %v134, -0.2
    %v140 = vmax.f32 %v135, -0.2
    %s141 = sadd.s32 %s77, 37
    %p142 = scmp.gt.s32.totalorder %s141, 37
    %p143 = scmp.le.s32.totalorder %s141, 37
    // Predicated region
    $region14: #{tpu_custom_call.1} parent=1 // pred_check
      %p144 = pneg %p143
    $region15: #{tpu_custom_call.1} parent=1 // pred_check_branch
      %146 = sbr.rel (%p144) target = $region17
    $region16: #{tpu_custom_call.1} parent=1 // pred_region
      %v147 = vld [vmem:[#allocation2] sm:$0xff]
      %v148 = vld [vmem:[#allocation2 + $0x8] sm:$0xff]
      %v149 = vld [vmem:[#allocation2 + $0x10] sm:$0xff]
      %v150 = vld [vmem:[#allocation2 + $0x18] sm:$0xff]
      %v151 = vld [vmem:[#allocation2 + $0x20] sm:$0x1f]
      %v152 = vadd.f32 %v147, %v136
      %v153 = vadd.f32 %v148, %v137
      %v154 = vadd.f32 %v149, %v138
      %v155 = vadd.f32 %v150, %v139
      %v156 = vadd.f32 %v151, %v140
      %vm157 = vcmask 7168
      %158 = vst.msk [vmem:[#allocation2] sm:$0xff] %vm157, %v152
      %159 = vst.msk [vmem:[#allocation2 + $0x8] sm:$0xff] %vm157, %v153
      %160 = vst.msk [vmem:[#allocation2 + $0x10] sm:$0xff] %vm157, %v154
      %161 = vst.msk [vmem:[#allocation2 + $0x18] sm:$0xff] %vm157, %v155
      %vm162 = vcmask 4096
      %163 = vst.msk [vmem:[#allocation2 + $0x20] sm:$0x1f] %vm162, %v156
    $region17: #{tpu_custom_call.1} parent=1 // pred_fallthru
      _
    // Predicated region
    $region18: #{tpu_custom_call.1} parent=1 // pred_check
      %p164 = pneg %p142
    $region19: #{tpu_custom_call.1} parent=1 // pred_check_branch
      %166 = sbr.rel (%p164) target = $region21
    $region20: #{tpu_custom_call.1} parent=1 // pred_region
      %v167 = vlaneseq
      %v168 = vshrl.u32 %v167, 7
      %v169 = vadd.s32 %v168, 8
      %v170 = vadd.s32 %v168, 16
      %v171 = vadd.s32 %v168, 24
      %v172 = vadd.s32 %v168, 32
      %v173 = vstv %s77
      %v174 = vadd.s32 %v168, %v173
      %v175 = vadd.s32 %v169, %v173
      %v176 = vadd.s32 %v170, %v173
      %v177 = vadd.s32 %v171, %v173
      %v178 = vadd.s32 %v172, %v173
      %v179 = vld [vmem:[#allocation2] sm:$0xff]
      %v180 = vld [vmem:[#allocation2 + $0x8] sm:$0xff]
      %v181 = vld [vmem:[#allocation2 + $0x10] sm:$0xff]
      %v182 = vld [vmem:[#allocation2 + $0x18] sm:$0xff]
      %v183 = vld [vmem:[#allocation2 + $0x20] sm:$0x1f]
      %vm184 = vcmp.lt.s32.totalorder %v174, 37
      %vm185 = vcmp.lt.s32.totalorder %v175, 37
      %vm186 = vcmp.lt.s32.totalorder %v176, 37
      %vm187 = vcmp.lt.s32.totalorder %v177, 37
      %vm188 = vcmp.lt.s32.totalorder %v178, 37
      %v189 = vsel %vm184, %v136, 0.0
      %v190 = vsel %vm185, %v137, 0.0
      %v191 = vsel %vm186, %v138, 0.0
      %v192 = vsel %vm187, %v139, 0.0
      %v193 = vsel %vm188, %v140, 0.0
      %v194 = vadd.f32 %v179, %v189
      %v195 = vadd.f32 %v180, %v190
      %v196 = vadd.f32 %v181, %v191
      %v197 = vadd.f32 %v182, %v192
      %v198 = vadd.f32 %v183, %v193
      %vm199 = vcmask 7168
      %200 = vst.msk [vmem:[#allocation2] sm:$0xff] %vm199, %v194
      %201 = vst.msk [vmem:[#allocation2 + $0x8] sm:$0xff] %vm199, %v195
      %202 = vst.msk [vmem:[#allocation2 + $0x10] sm:$0xff] %vm199, %v196
      %203 = vst.msk [vmem:[#allocation2 + $0x18] sm:$0xff] %vm199, %v197
      %vm204 = vcmask 4096
      %205 = vst.msk [vmem:[#allocation2 + $0x20] sm:$0x1f] %vm204, %v198
    $region21: #{tpu_custom_call.1} parent=1 // pred_fallthru
      _
    // Predicated region
    $region22: #{tpu_custom_call.1} parent=1 // pred_check
      %p206 = pneg %p78
    $region23: #{tpu_custom_call.1} parent=1 // pred_check_branch
      %208 = sbr.rel (%p206) target = $region25
    $region24: #{tpu_custom_call.1} parent=1 // pred_region
      %v209 = vld [vmem:[#allocation2] sm:$0xff]
      %v210 = vld [vmem:[#allocation2 + $0x8] sm:$0xff]
      %v211 = vld [vmem:[#allocation2 + $0x10] sm:$0xff]
      %v212 = vld [vmem:[#allocation2 + $0x18] sm:$0xff]
      %v213 = vld [vmem:[#allocation2 + $0x20] sm:$0x1f]
      %vm214 = vcmask 7168
      %v215 = vsel %vm214, %v209, 0.0
      %v216 = vsel %vm214, %v210, 0.0
      %v217 = vadd.f32 %v215, %v216
      %v218 = vsel %vm214, %v211, 0.0
      %v219 = vadd.f32 %v217, %v218
      %v220 = vsel %vm214, %v212, 0.0
      %v221 = vadd.f32 %v219, %v220
      %vm222 = vcmask 4096
      %v223 = vsel %vm222, %v213, 0.0
      %v224 = vadd.f32 %v221, %v223
      %225 = vadd.xlane.f32.xlu0 %v224
      %v226 = vpop.xlane.xlu0 %225
      %v227 = vrot.slane %v226, 4
      %v228 = vadd.f32 %v226, %v227
      %v229 = vrot.slane %v228, 2
      %v230 = vadd.f32 %v228, %v229
      %v231 = vrot.slane %v230, 1
      %v232 = vadd.f32 %v230, %v231
      %s233 = vtos %v232
      %v234 = vstv %s233
      %235 = vst [vmem:[#allocation3] sm:$0xff] %v234
    $region25: #{tpu_custom_call.1} parent=1 // pred_fallthru
      _
    // Predicated region
    $region26: #{tpu_custom_call.1} parent=1 // pred_check
      _
    $region27: #{tpu_custom_call.1} parent=1 // pred_check_branch
      %237 = sbr.rel (0) target = $region29
    $region28: #{tpu_custom_call.1} parent=1 // pred_region
      %s239 = ssub.s32 128, 128
      %240 = vsyncadd [#allocation4], %s239
      %s242 = sshll.u32 [#allocation3], 4
      %s243 = int_to_ptr.vmem [resolvable:$true] %s242
      %245 = dma.vmem_to_hbm [thread:$0]  %s243, 128, %s2, [#allocation4]
    $region29: #{tpu_custom_call.1} parent=1 // pred_fallthru
      _
    // Predicated region
    $region30: #{tpu_custom_call.1} parent=1 // pred_check
      _
    $region31: #{tpu_custom_call.1} parent=1 // pred_check_branch
      %247 = sbr.rel (0) target = $region33
    $region32: #{tpu_custom_call.1} parent=1 // pred_region
      %248 = dma.done [#allocation4], 128
    $region33: #{tpu_custom_call.1} parent=1 // pred_fallthru
      _
    %249 = vsyncpa [#allocation4], 1

</llo_original>
